<compile_context>
chip_gen: v7x
topology: tpu7x:2x2x1
jax: 0.10.0
libtpu: 0.0.40
codegen_flags: <defaults>
</compile_context>

<pallas_src>
import functools
import math

import jax
import jax.numpy as jnp
from jax.experimental import pallas as pl
from jax.experimental.pallas import tpu as pltpu


_VMEM_LIMIT_BYTES = 48 * 1024 * 1024   # headroom below v7x's 64 MiB physical VMEM


# ----------------------------------------------------------------------------
# Pallas kernels
# ----------------------------------------------------------------------------
def _upconv2x2_kernel(x_ref, w_ref, b_ref, o_ref):
    # x_ref: (H, W, Cin)          w_ref: (Cin, 2*Cout)   [columns = (dx, cout)]
    # b_ref: (1, 2*Cout)          o_ref: (H, W, 2*Cout)  [one dy-parity plane]
    H, W, Cin = x_ref.shape
    Co2 = o_ref.shape[-1]
    xf = x_ref[...].reshape(H * W, Cin).astype(jnp.bfloat16)
    y = jnp.dot(xf, w_ref[...], preferred_element_type=jnp.float32) + b_ref[0]
    o_ref[...] = y.reshape(H, W, Co2).astype(o_ref.dtype)


def _conv3x3_kernel(*refs, kx, has_skip):
    # grid = (N, Cout_tiles, K_steps); K_steps spans x-channel tiles then
    # skip-channel tiles (fused torch.cat).  Accumulate in a VMEM f32 scratch.
    if has_skip:
        x_ref, s_ref, w_ref, b_ref, o_ref, acc_ref, xp_ref = refs
    else:
        x_ref, w_ref, b_ref, o_ref, acc_ref, xp_ref = refs
        s_ref = None

    k = pl.program_id(2)
    nk = pl.num_programs(2)
    H, W, tco = o_ref.shape
    tc = x_ref.shape[-1]

    @pl.when(k == 0)
    def _init():
        acc_ref[...] = jnp.zeros(acc_ref.shape, acc_ref.dtype)
        # zero the whole padded slab once per (n, cout-tile); the interior is
        # overwritten below every K-step, the 1-pixel halo stays zero (= pad=1).
        xp_ref[...] = jnp.zeros(xp_ref.shape, xp_ref.dtype)

    # Fill the interior of the padded VMEM slab from x (first kx steps) or the
    # cropped skip feature (remaining steps) — fuses F.pad + torch.cat.
    if has_skip:
        @pl.when(k < kx)
        def _fill_x():
            xp_ref[pl.ds(1, H), pl.ds(1, W), :] = x_ref[...].astype(xp_ref.dtype)

        @pl.when(k >= kx)
        def _fill_skip():
            xp_ref[pl.ds(1, H), pl.ds(1, W), :] = s_ref[...].astype(xp_ref.dtype)
    else:
        xp_ref[pl.ds(1, H), pl.ds(1, W), :] = x_ref[...].astype(xp_ref.dtype)

    acc = acc_ref[...]
    for dy in range(3):
        row = xp_ref[dy:dy + H, :, :]                       # (H, W+2, tc)
        for dx in range(3):
            patch = row[:, dx:dx + W, :].reshape(H * W, tc)  # bf16 operand
            acc += jnp.dot(patch, w_ref[dy, dx],
                           preferred_element_type=jnp.float32)
    acc_ref[...] = acc

    @pl.when(k == nk - 1)
    def _finalize():
        y = acc_ref[...] + b_ref[0]          # f32 epilogue (v5e-friendly)
        o_ref[...] = jnp.maximum(y, 0.0).reshape(H, W, tco).astype(o_ref.dtype)


# ----------------------------------------------------------------------------
# Pallas wrappers
# ----------------------------------------------------------------------------
def conv_transpose2x2(x, w, b):
    """x: (N, H, W, Cin) -> (N, 2H, 2W, Cout); stride = kernel = 2 (no overlap)."""
    N, H, W, Cin = x.shape
    Cout = w.shape[-1]
    # (dy, dx, Cin, Cout) -> (dy, Cin, dx*Cout+co): the dx interleave lands in
    # the lane dimension, so the post-kernel reshape is a free (contiguous) one.
    w_r = jnp.transpose(w, (0, 2, 1, 3)).reshape(2, Cin, 2 * Cout)
    w_r = w_r.astype(jnp.bfloat16)
    b2 = jnp.concatenate([b, b]).reshape(1, 2 * Cout).astype(jnp.float32)

    out = pl.pallas_call(
        _upconv2x2_kernel,
        out_shape=jax.ShapeDtypeStruct((N, H, 2, W, 2 * Cout), jnp.float32),
        grid=(N, 2),
        in_specs=[
            pl.BlockSpec((None, H, W, Cin), lambda n, dy: (n, 0, 0, 0)),
            pl.BlockSpec((None, Cin, 2 * Cout), lambda n, dy: (dy, 0, 0)),
            pl.BlockSpec((1, 2 * Cout), lambda n, dy: (0, 0)),
        ],
        out_specs=pl.BlockSpec((None, H, None, W, 2 * Cout),
                               lambda n, dy: (n, 0, dy, 0, 0)),
        compiler_params=pltpu.CompilerParams(
            dimension_semantics=("parallel", "parallel"),
            vmem_limit_bytes=_VMEM_LIMIT_BYTES),
    )(x, w_r, b2)
    # (N, H, 2, W, 2*Cout) -> (N, 2H, 2W, Cout): contiguous merge, no transpose.
    return out.reshape(N, 2 * H, 2 * W, Cout)


def _channel_tile(*sizes):
    g = 0
    for s in sizes:
        if s:
            g = math.gcd(g, s)
    for t in (512, 256, 128, 64, 32, 16, 8):
        if t <= g and g % t == 0:
            return t
    return g


def conv3x3_relu(x, w, b, skip=None, *, cin_tile=None, cout_tile=None):
    """relu(conv3x3(cat([x, skip], ch), pad=1)).  skip may be None."""
    N, H, W, Cx = x.shape
    Cout = w.shape[-1]
    Cs = 0 if skip is None else skip.shape[-1]
    assert w.shape[:3] == (3, 3, Cx + Cs), (w.shape, Cx, Cs)

    tc = cin_tile or _channel_tile(Cx, Cs)
    assert Cx % tc == 0 and (Cs == 0 or Cs % tc == 0)
    assert tc == Cx or tc % 128 == 0       # BlockSpec minor-dim rule
    kx, ks = Cx // tc, Cs // tc
    nk = kx + ks

    tco = cout_tile or (Cout if Cout <= 256 else 128)
    assert Cout % tco == 0
    nco = Cout // tco

    wq = w.astype(jnp.bfloat16)
    b2 = b.reshape(1, Cout).astype(jnp.float32)

    kernel = functools.partial(_conv3x3_kernel, kx=kx, has_skip=skip is not None)

    in_specs = [pl.BlockSpec((None, H, W, tc),
                             lambda n, co, k: (n, 0, 0, jnp.minimum(k, kx - 1)))]
    args = [x]
    if skip is not None:
        in_specs.append(pl.BlockSpec((None, H, W, tc),
                                     lambda n, co, k: (n, 0, 0,
                                                       jnp.maximum(k - kx, 0))))
        args.append(skip)
    in_specs += [
        pl.BlockSpec((3, 3, tc, tco), lambda n, co, k: (0, 0, k, co)),
        pl.BlockSpec((1, tco), lambda n, co, k: (0, co)),
    ]
    args += [wq, b2]

    return pl.pallas_call(
        kernel,
        out_shape=jax.ShapeDtypeStruct((N, H, W, Cout), jnp.float32),
        grid=(N, nco, nk),
        in_specs=in_specs,
        out_specs=pl.BlockSpec((None, H, W, tco), lambda n, co, k: (n, 0, 0, co)),
        scratch_shapes=[
            pltpu.VMEM((H * W, tco), jnp.float32),          # f32 accumulator
            pltpu.VMEM((H + 2, W + 2, tc), jnp.bfloat16),    # padded input slab
        ],
        compiler_params=pltpu.CompilerParams(
            dimension_semantics=("parallel", "parallel", "arbitrary"),
            vmem_limit_bytes=_VMEM_LIMIT_BYTES),
    )(*args)


# ----------------------------------------------------------------------------
# Decoder glue (crop / loop over stages)
# ----------------------------------------------------------------------------
def center_crop_nhwc(f, h, w):
    H, W = f.shape[1], f.shape[2]
    top = int(round((H - h) / 2.0))    # torchvision CenterCrop formula
    left = int(round((W - w) / 2.0))
    return f[:, top:top + h, left:left + w, :]


def decoder_forward(params, x_nchw, encoder_features_nchw):
    x = jnp.transpose(x_nchw, (0, 2, 3, 1))                  # NCHW -> NHWC
    for p, feat in zip(params, encoder_features_nchw):
        x = conv_transpose2x2(x, p["up_w"], p["up_b"])
        f = jnp.transpose(feat, (0, 2, 3, 1))
        skip = center_crop_nhwc(f, x.shape[1], x.shape[2])
        # fused: torch.cat([x, skip], dim=1) -> conv3x3 -> relu
        x = conv3x3_relu(x, p["c1_w"], p["c1_b"], skip=skip)
        x = conv3x3_relu(x, p["c2_w"], p["c2_b"])
    return jnp.transpose(x, (0, 3, 1, 2))                    # NHWC -> NCHW


# ----------------------------------------------------------------------------
# Pure-JAX reference (full f32, for correctness check)
# ----------------------------------------------------------------------------
def _conv3x3_relu_ref(x, w, b):
    y = jax.lax.conv_general_dilated(
        x, w, (1, 1), ((1, 1), (1, 1)),
        dimension_numbers=("NHWC", "HWIO", "NHWC"))
    return jnp.maximum(y + b, 0.0)


def _conv_transpose2x2_ref(x, w, b):
    y = jnp.einsum("nhwc,pqco->nhpwqo", x, w)
    N, H, _, W, _, Co = y.shape
    return y.reshape(N, 2 * H, 2 * W, Co) + b


def decoder_ref(params, x_nchw, encoder_features_nchw):
    x = jnp.transpose(x_nchw, (0, 2, 3, 1))
    for p, feat in zip(params, encoder_features_nchw):
        x = _conv_transpose2x2_ref(x, p["up_w"], p["up_b"])
        f = jnp.transpose(feat, (0, 2, 3, 1))
        y = center_crop_nhwc(f, x.shape[1], x.shape[2])
        x = jnp.concatenate([x, y], axis=-1)
        x = _conv3x3_relu_ref(x, p["c1_w"], p["c1_b"])
        x = _conv3x3_relu_ref(x, p["c2_w"], p["c2_b"])
    return jnp.transpose(x, (0, 3, 1, 2))


# ----------------------------------------------------------------------------
# Deterministic parameter init (shapes follow Decoder.__init__, scaled down)
# ----------------------------------------------------------------------------
def init_params(key, dec_channels):
    params = []
    for i in range(len(dec_channels) - 1):
        cin, cout = dec_channels[i], dec_channels[i + 1]
        key, k0, k1, k2, k3, k4, k5 = jax.random.split(key, 7)
        s_up = 1.0 / (cin * 4) ** 0.5
        s_c1 = 1.0 / (cin * 9) ** 0.5
        s_c2 = 1.0 / (cout * 9) ** 0.5
        params.append(dict(
            up_w=jax.random.normal(k0, (2, 2, cin, cout), jnp.float32) * s_up,
            up_b=jax.random.normal(k1, (cout,), jnp.float32) * s_up,
            c1_w=jax.random.normal(k2, (3, 3, cin, cout), jnp.float32) * s_c1,
            c1_b=jax.random.normal(k3, (cout,), jnp.float32) * s_c1,
            c2_w=jax.random.normal(k4, (3, 3, cout, cout), jnp.float32) * s_c2,
            c2_b=jax.random.normal(k5, (cout,), jnp.float32) * s_c2,
        ))
    return params


# ----------------------------------------------------------------------------
if __name__ == "__main__":
    key = jax.random.PRNGKey(0)
    dec_channels = [32, 16, 8]          # scaled-down version of [1024,...,64]
    N, H0, W0 = 2, 4, 4

    key, kx, ke0, ke1 = jax.random.split(key, 4)
    params = init_params(key, dec_channels)

    # PyTorch-style NCHW inputs.
    x = jax.random.normal(kx, (N, dec_channels[0], H0, W0), jnp.float32)
    encoder_features = [
        # stage 0: upconv output is (N,16,8,8); feature is larger -> cropped
        jax.random.normal(ke0, (N, dec_channels[1], 10, 10), jnp.float32),
        # stage 1: upconv output is (N,8,16,16); feature matches exactly
        jax.random.normal(ke1, (N, dec_channels[2], 16, 16), jnp.float32),
    ]

    out = decoder_forward(params, x, encoder_features)
    out = jax.block_until_ready(out)
    assert out.shape == (N, dec_channels[-1], H0 * 4, W0 * 4), out.shape

    ref = jax.block_until_ready(decoder_ref(params, x, encoder_features))
    # bf16 MXU operands (f32 accumulate) vs. full-f32 reference.
    assert jnp.allclose(out, ref, atol=2e-2, rtol=2e-2), (
        float(jnp.max(jnp.abs(out - ref))))

    print("KERNEL_OK")
</pallas_src>

<mosaic_0001>
module attributes {stable_mosaic.version = 11 : i64} {
  func.func @_upconv2x2_kernel(%arg0: i32, %arg1: i32, %arg2: memref<1x4x4x32xf32, #tpu.memory_space<vmem>>, %arg3: memref<1x32x32xbf16, #tpu.memory_space<vmem>>, %arg4: memref<1x32xf32, #tpu.memory_space<vmem>>, %arg5: memref<1x4x1x4x32xf32, #tpu.memory_space<vmem>>) attributes {dimension_semantics = [#tpu.dimension_semantics<parallel>, #tpu.dimension_semantics<parallel>], iteration_bounds = array<i64: 2, 2>, scalar_prefetch = 0 : i64, scratch_operands = 0 : i64, tpu.core_type = #tpu.core_type<tc>, window_params = [{transform_indices = @transform_0, window_bounds = array<i64: 1, 4, 4, 32>}, {transform_indices = @transform_1, window_bounds = array<i64: 1, 32, 32>}, {pipeline_mode = #tpu.pipeline_mode<synchronous>, transform_indices = @transform_2, window_bounds = array<i64: 1, 32>}, {transform_indices = @transform_3, window_bounds = array<i64: 1, 4, 1, 4, 32>}]} {
    %c0 = arith.constant 0 : index
    %c0_0 = arith.constant 0 : index
    %c0_1 = arith.constant 0 : index
    %c0_2 = arith.constant 0 : index
    %0 = vector.load %arg2[%c0, %c0_0, %c0_1, %c0_2] : memref<1x4x4x32xf32, #tpu.memory_space<vmem>>, vector<1x4x4x32xf32>
    %1 = vector.shape_cast %0 : vector<1x4x4x32xf32> to vector<4x4x32xf32>
    %2 = vector.shape_cast %1 : vector<4x4x32xf32> to vector<16x32xf32>
    %3 = arith.truncf %2 : vector<16x32xf32> to vector<16x32xbf16>
    %c0_3 = arith.constant 0 : index
    %c0_4 = arith.constant 0 : index
    %c0_5 = arith.constant 0 : index
    %4 = vector.load %arg3[%c0_3, %c0_4, %c0_5] : memref<1x32x32xbf16, #tpu.memory_space<vmem>>, vector<1x32x32xbf16>
    %5 = vector.shape_cast %4 : vector<1x32x32xbf16> to vector<32x32xbf16>
    %cst = arith.constant dense<0.000000e+00> : vector<16x32xf32>
    %6 = tpu.matmul %3, %5, %cst {dimension_numbers = #tpu.dot_dimension_numbers<[1], [0], [0], [1], [0, 0, 1, 1], [], []>} : vector<16x32xbf16>, vector<32x32xbf16>, vector<16x32xf32> -> vector<16x32xf32>
    %c0_6 = arith.constant 0 : index
    %c0_7 = arith.constant 0 : index
    %7 = vector.load %arg4[%c0_6, %c0_7] : memref<1x32xf32, #tpu.memory_space<vmem>>, vector<1x32xf32>
    %8 = vector.shape_cast %7 : vector<1x32xf32> to vector<32xf32>
    %9 = vector.shape_cast %8 : vector<32xf32> to vector<1x32xf32>
    %10 = vector.broadcast %9 : vector<1x32xf32> to vector<16x32xf32>
    %11 = arith.addf %6, %10 : vector<16x32xf32>
    %12 = vector.shape_cast %11 : vector<16x32xf32> to vector<4x4x32xf32>
    %c0_8 = arith.constant 0 : index
    %c0_9 = arith.constant 0 : index
    %c0_10 = arith.constant 0 : index
    %c0_11 = arith.constant 0 : index
    %c0_12 = arith.constant 0 : index
    %13 = vector.load %arg5[%c0_8, %c0_9, %c0_10, %c0_11, %c0_12] : memref<1x4x1x4x32xf32, #tpu.memory_space<vmem>>, vector<1x4x1x4x32xf32>
    %14 = vector.shape_cast %13 : vector<1x4x1x4x32xf32> to vector<4x4x32xf32>
    %15 = vector.shape_cast %12 : vector<4x4x32xf32> to vector<1x4x1x4x32xf32>
    tpu.vector_store %arg5[%c0_8, %c0_9, %c0_10, %c0_11, %c0_12], %15 {strides = array<i32>} : memref<1x4x1x4x32xf32, #tpu.memory_space<vmem>>, vector<1x4x1x4x32xf32>,
    return
  }
  func.func @transform_0(%arg0: i32, %arg1: i32) -> (i32, i32, i32, i32) {
    %c0_i32 = arith.constant 0 : i32
    %c0_i32_0 = arith.constant 0 : i32
    %c0_i32_1 = arith.constant 0 : i32
    %c0_i32_2 = arith.constant 0 : i32
    return %arg0, %c0_i32, %c0_i32_0, %c0_i32_1 : i32, i32, i32, i32
  }
  func.func @transform_1(%arg0: i32, %arg1: i32) -> (i32, i32, i32) {
    %c0_i32 = arith.constant 0 : i32
    %c0_i32_0 = arith.constant 0 : i32
    %c0_i32_1 = arith.constant 0 : i32
    return %arg1, %c0_i32, %c0_i32_0 : i32, i32, i32
  }
  func.func @transform_2(%arg0: i32, %arg1: i32) -> (i32, i32) {
    %c0_i32 = arith.constant 0 : i32
    %c0_i32_0 = arith.constant 0 : i32
    %c0_i32_1 = arith.constant 0 : i32
    return %c0_i32, %c0_i32_0 : i32, i32
  }
  func.func @transform_3(%arg0: i32, %arg1: i32) -> (i32, i32, i32, i32, i32) {
    %c0_i32 = arith.constant 0 : i32
    %c0_i32_0 = arith.constant 0 : i32
    %c0_i32_1 = arith.constant 0 : i32
    %c0_i32_2 = arith.constant 0 : i32
    return %arg0, %c0_i32, %arg1, %c0_i32_0, %c0_i32_1 : i32, i32, i32, i32, i32
  }
}

</mosaic_0001>

<llo_original>
// kernel: tpu_custom_call.1
$region0: #{tpu_custom_call.1}
  #allocation0 [shape = 'u32[]', space=smem, size = 0x4, offset = 0x4, fixed_abs, tag = 'smem constant byte address 0x4 - core index']
  #allocation1 [shape = 'u32[144,128]{1,0:T(1,128)}', space=vmem, size = 0x12000, scoped, tag = 'internal scratch']
  %s0 = inlined_call_operand.hbm [shape: f32[2,4,4,32], index: 0, kind: input, shape index: {}]
  %s1 = inlined_call_operand.hbm [shape: bf16[2,32,32], index: 1, kind: input, shape index: {}]
  %s2 = inlined_call_operand.vmem [shape: f32[1,32], index: 2, kind: input, shape index: {}]
  %s3 = inlined_call_operand.hbm [shape: f32[2,4,2,4,32], index: 3, kind: output, shape index: {}]
  %s4 = sld [smem:[#allocation0]]
  $region53: #{tpu_custom_call.1} parent=0
    _
  %s6 = ssub.s32 1, %s4
  %s7 = scalar_select 0, %s6, %s4
  $region1: #{tpu_custom_call.1} parent=0
    #allocation2 [shape = 'u8[16384]{0}', space=vmem, size = 0x4000, scoped, tag = 'input window, operand 0']
    #allocation3 [shape = 's32[2]{0}', space=sflag, size = 0x8, scoped, tag = 'scoped memory for tpu_custom_call.1']
    #allocation4 [shape = 's32[2]{0}', space=sflag, size = 0x8, scoped, tag = 'scoped memory for tpu_custom_call.1']
    #allocation5 [shape = 'u8[16384]{0}', space=vmem, size = 0x4000, scoped, tag = 'input window, operand 1']
    #allocation6 [shape = 's32[2]{0}', space=sflag, size = 0x8, scoped, tag = 'scoped memory for tpu_custom_call.1']
    #allocation7 [shape = 'u8[16384]{0}', space=vmem, size = 0x4000, scoped, tag = 'output window, operand 0']
    %8 = vsyncpa [#allocation3], 0
    %s9 = scalar_lea.sflag [#allocation3], 1
    %10 = vsyncpa %s9, 0
    %11 = vsyncpa [#allocation6], 0
    %s12 = scalar_lea.sflag [#allocation6], 1
    %13 = vsyncpa %s12, 0
    %14 = vsyncpa [#allocation4], 0
    %s15 = scalar_lea.sflag [#allocation4], 1
    %16 = vsyncpa %s15, 0
    loop: start=0, step=1, limit=6
    $region2: #{tpu_custom_call.1} parent=1 // loop_pre_header
      _
    $region3: #{tpu_custom_call.1} parent=1 // loop_header
      %s18 = sphi 0, %s22
      %p19 = scmp.ge.s32.totalorder %s18, 6
      %s25 = sphi 0, %s37
      %s26 = sphi 0, %s33
      %s27 = sphi 0, %s25
      %s28 = sphi 0, %s26
      %s29 = sphi 0, %s27
      %s30 = sphi 0, %s28
      %s40 = sphi 0, %s42
      %s43 = sphi 0, %s40
      %s44 = sphi 0, %s43
      %s60 = sphi 0, %s44
      %s66 = sphi 0, %s68
      %s69 = sphi 0, %s66
      %s70 = sphi 0, %s69
      %s86 = sphi 0, %s70
      %s90 = sphi 0, %s90
      %s92 = sphi 0, %s90
      %s93 = sphi 0, %s92
      %s107 = sphi 0, %s93
      %s115 = sphi 0, %s117
      %s118 = sphi 0, %s115
      %s119 = sphi 0, %s118
      %s135 = sphi 0, %s119
    $region4: #{tpu_custom_call.1} parent=1 // loop_header_branch
      %21 = sbr.rel (%p19) target = $region8
    $region5: #{tpu_custom_call.1} parent=1 // loop_body
      %s23 = ssub.s32 %s18, 1
      %s24 = ssub.s32 %s18, 2
      %s31 = sadd.s32 1, %s26
      %p32 = scmp.ge.s32.totalorder %s31, 2
      %s33 = scalar_select %p32, 0, %s31
      %s34 = sadd.s32 1, %s25
      %s35 = scalar_select %p32, %s34, %s25
      %p36 = scmp.ge.s32.totalorder %s35, 2
      %s37 = scalar_select %p36, 0, %s35
      %s38 = ssub.s32 %s25, %s37
      %p39 = scmp.eq.s32.totalorder %s38, 0
      %s41 = sadd.s32 %s40, 1
      %s42 = scalar_select %p39, %s40, %s41
      %p45 = pneg %p39
      %p46 = scmp.eq.s32.totalorder %s18, 3
      %p47 = por %p45, %p46
      %p48 = scmp.ne.s32.totalorder %s40, %s43
      %p49 = scmp.eq.s32.totalorder %s18, 0
      %p50 = por %p48, %p49
      %p51 = scmp.ne.s32.totalorder %s40, %s43
      %p52 = scmp.eq.s32.totalorder %s23, 3
      %p53 = por %p51, %p52
      %p54 = scmp.ne.s32.totalorder %s43, %s44
      %p55 = scmp.eq.s32.totalorder %s23, 0
      %p56 = por %p54, %p55
      %p57 = scmp.ne.s32.totalorder %s43, %s44
      %p58 = scmp.eq.s32.totalorder %s24, 3
      %p59 = por %p57, %p58
      %p61 = scmp.ne.s32.totalorder %s44, %s60
      %p62 = scmp.eq.s32.totalorder %s24, 0
      %p63 = por %p61, %p62
      %s64 = ssub.s32 %s26, %s33
      %p65 = scmp.eq.s32.totalorder %s64, 0
      %s67 = sadd.s32 %s66, 1
      %s68 = scalar_select %p65, %s66, %s67
      %p71 = pneg %p65
      %p72 = scmp.eq.s32.totalorder %s18, 3
      %p73 = por %p71, %p72
      %p74 = scmp.ne.s32.totalorder %s66, %s69
      %p75 = scmp.eq.s32.totalorder %s18, 0
      %p76 = por %p74, %p75
      %p77 = scmp.ne.s32.totalorder %s66, %s69
      %p78 = scmp.eq.s32.totalorder %s23, 3
      %p79 = por %p77, %p78
      %p80 = scmp.ne.s32.totalorder %s69, %s70
      %p81 = scmp.eq.s32.totalorder %s23, 0
      %p82 = por %p80, %p81
      %p83 = scmp.ne.s32.totalorder %s69, %s70
      %p84 = scmp.eq.s32.totalorder %s24, 3
      %p85 = por %p83, %p84
      %p87 = scmp.ne.s32.totalorder %s70, %s86
      %p88 = scmp.eq.s32.totalorder %s24, 0
      %p89 = por %p87, %p88
      %s91 = sadd.s32 %s90, 1
      %p94 = scmp.eq.s32.totalorder %s18, 3
      %p95 = scmp.ne.s32.totalorder %s90, %s92
      %p96 = scmp.eq.s32.totalorder %s18, 0
      %p97 = por %p95, %p96
      %p98 = scmp.ne.s32.totalorder %s90, %s92
      %p99 = scmp.eq.s32.totalorder %s23, 3
      %p100 = por %p98, %p99
      %p101 = scmp.ne.s32.totalorder %s92, %s93
      %p102 = scmp.eq.s32.totalorder %s23, 0
      %p103 = por %p101, %p102
      %p104 = scmp.ne.s32.totalorder %s92, %s93
      %p105 = scmp.eq.s32.totalorder %s24, 3
      %p106 = por %p104, %p105
      %p108 = scmp.ne.s32.totalorder %s93, %s107
      %p109 = scmp.eq.s32.totalorder %s24, 0
      %p110 = por %p108, %p109
      %s111 = ssub.s32 %s25, %s37
      %s112 = ssub.s32 %s26, %s33
      %s113 = sor.u32 %s111, %s112
      %p114 = scmp.eq.s32.totalorder %s113, 0
      %s116 = sadd.s32 %s115, 1
      %s117 = scalar_select %p114, %s115, %s116
      %p120 = pneg %p114
      %p121 = scmp.eq.s32.totalorder %s18, 3
      %p122 = por %p120, %p121
      %p123 = scmp.ne.s32.totalorder %s115, %s118
      %p124 = scmp.eq.s32.totalorder %s18, 0
      %p125 = por %p123, %p124
      %p126 = scmp.ne.s32.totalorder %s115, %s118
      %p127 = scmp.eq.s32.totalorder %s23, 3
      %p128 = por %p126, %p127
      %p129 = scmp.ne.s32.totalorder %s118, %s119
      %p130 = scmp.eq.s32.totalorder %s23, 0
      %p131 = por %p129, %p130
      %p132 = scmp.ne.s32.totalorder %s118, %s119
      %p133 = scmp.eq.s32.totalorder %s24, 3
      %p134 = por %p132, %p133
      %p136 = scmp.ne.s32.totalorder %s119, %s135
      %p137 = scmp.eq.s32.totalorder %s24, 0
      %p138 = por %p136, %p137
      %p139 = scmp.le.s32.totalorder 1, %s18
      %p140 = scmp.lt.s32.totalorder %s18, 5
      %p141 = pnand %p139, %p140
      %p142 = pneg %p141
      // Predicated region
      $region9: #{tpu_custom_call.1} parent=5 // pred_check
        _
      $region10: #{tpu_custom_call.1} parent=5 // pred_check_branch
        %144 = sbr.rel (%p141) target = $region12
      $region11: #{tpu_custom_call.1} parent=5 // pred_region
        %s145 = ssub.s32 %s18, 1
        // Predicated region
        $region13: #{tpu_custom_call.1} parent=11 // pred_check
          %p146 = pneg %p103
        $region14: #{tpu_custom_call.1} parent=11 // pred_check_branch
          %148 = sbr.rel (%p146) target = $region16
        $region15: #{tpu_custom_call.1} parent=11 // pred_region
          _
        $region16: #{tpu_custom_call.1} parent=11 // pred_fallthru
          _
      $region12: #{tpu_custom_call.1} parent=5 // pred_fallthru
        _
      %p149 = scmp.lt.s32.totalorder %s18, 4
      // Predicated region
      $region17: #{tpu_custom_call.1} parent=5 // pred_check
        %p150 = pneg %p149
      $region18: #{tpu_custom_call.1} parent=5 // pred_check_branch
        %152 = sbr.rel (%p150) target = $region20
      $region19: #{tpu_custom_call.1} parent=5 // pred_region
        // Predicated region
        $region21: #{tpu_custom_call.1} parent=19 // pred_check
          %p153 = pneg %p50
        $region22: #{tpu_custom_call.1} parent=19 // pred_check_branch
          %155 = sbr.rel (%p153) target = $region24
        $region23: #{tpu_custom_call.1} parent=19 // pred_region
          %s156 = sand.u32 %s40, 1
          %s157 = scalar_lea.sflag [#allocation3], %s156
          %s158 = sand.u32 %s40, 1
          %s159 = smul.addr %s158, 16
          %s160 = scalar_lea.vmem [#allocation2], %s159
          %s162 = ssub.s32 256, 256
          %163 = vsyncadd %s157, %s162
          %s164 = smul.addr %s25, 4
          %s165 = smul.addr %s164, 64
          %s166 = scalar_lea.hbm %s0, %s165
          %s167 = sshll.u32 %s160, 4
          %s168 = int_to_ptr.vmem [resolvable:$true] %s167
          %173 = dma.hbm_to_vmem [thread:$0]  %s166, 256, %s168, %s157, 64, 64, 4
        $region24: #{tpu_custom_call.1} parent=19 // pred_fallthru
          _
        // Predicated region
        $region25: #{tpu_custom_call.1} parent=19 // pred_check
          %p174 = pneg %p76
        $region26: #{tpu_custom_call.1} parent=19 // pred_check_branch
          %176 = sbr.rel (%p174) target = $region28
        $region27: #{tpu_custom_call.1} parent=19 // pred_region
          %s177 = sand.u32 %s66, 1
          %s178 = scalar_lea.sflag [#allocation6], %s177
          %s179 = sand.u32 %s66, 1
          %s180 = smul.addr %s179, 16
          %s181 = scalar_lea.vmem [#allocation5], %s180
          %s183 = ssub.s32 256, 256
          %184 = vsyncadd %s178, %s183
          %s185 = smul.addr %s26, 4
          %s186 = smul.addr %s185, 64
          %s187 = scalar_lea.hbm %s1, %s186
          %s188 = sshll.u32 %s181, 4
          %s189 = int_to_ptr.vmem [resolvable:$true] %s188
          %194 = dma.hbm_to_vmem [thread:$0]  %s187, 256, %s189, %s178, 64, 64, 4
        $region28: #{tpu_custom_call.1} parent=19 // pred_fallthru
          _
      $region20: #{tpu_custom_call.1} parent=5 // pred_fallthru
        _
      %p195 = scmp.le.s32.totalorder 1, %s18
      %p196 = scmp.lt.s32.totalorder %s18, 5
      %p197 = pnand %p195, %p196
      %p198 = pneg %p197
      // Predicated region
      $region29: #{tpu_custom_call.1} parent=5 // pred_check
        _
      $region30: #{tpu_custom_call.1} parent=5 // pred_check_branch
        %200 = sbr.rel (%p197) target = $region32
      $region31: #{tpu_custom_call.1} parent=5 // pred_region
        %s201 = ssub.s32 %s18, 1
        %s202 = sand.u32 %s43, 1
        %s203 = scalar_lea.sflag [#allocation3], %s202
        %s204 = sand.u32 %s43, 1
        %s205 = smul.addr %s204, 16
        %s206 = scalar_lea.vmem [#allocation2], %s205
        // Predicated region
        $region33: #{tpu_custom_call.1} parent=31 // pred_check
          %p207 = pneg %p56
        $region34: #{tpu_custom_call.1} parent=31 // pred_check_branch
          %209 = sbr.rel (%p207) target = $region36
        $region35: #{tpu_custom_call.1} parent=31 // pred_region
          %210 = dma.done %s203, 256
        $region36: #{tpu_custom_call.1} parent=31 // pred_fallthru
          _
        %s211 = sand.u32 %s69, 1
        %s212 = scalar_lea.sflag [#allocation6], %s211
        %s213 = sand.u32 %s69, 1
        %s214 = smul.addr %s213, 16
        %s215 = scalar_lea.vmem [#allocation5], %s214
        // Predicated region
        $region37: #{tpu_custom_call.1} parent=31 // pred_check
          %p216 = pneg %p82
        $region38: #{tpu_custom_call.1} parent=31 // pred_check_branch
          %218 = sbr.rel (%p216) target = $region40
        $region39: #{tpu_custom_call.1} parent=31 // pred_region
          %219 = dma.done %s212, 256
        $region40: #{tpu_custom_call.1} parent=31 // pred_fallthru
          _
        %s220 = sand.u32 %s43, 1
        %s221 = scalar_lea.sflag [#allocation3], %s220
        %s222 = sand.u32 %s43, 1
        %s223 = smul.addr %s222, 16
        %s224 = scalar_lea.vmem [#allocation2], %s223
        %p225 = pneg %p56
        %p226 = pneg %p53
        %s227 = sand.u32 %s69, 1
        %s228 = scalar_lea.sflag [#allocation6], %s227
        %s229 = sand.u32 %s69, 1
        %s230 = smul.addr %s229, 16
        %s231 = scalar_lea.vmem [#allocation5], %s230
        %p232 = pneg %p82
        %p233 = pneg %p79
        %p234 = pneg %p103
        %p235 = pneg %p100
        %p236 = pneg %p131
        %p237 = pneg %p128
        %s238 = sand.u32 %s118, 1
        %s239 = scalar_lea.sflag [#allocation4], %s238
        %s240 = sand.u32 %s118, 1
        %s241 = smul.addr %s240, 16
        %s242 = scalar_lea.vmem [#allocation7], %s241
        %v244 = vld [vmem:[%s206] sm:$0xf]
        %v245 = vld [vmem:[%s206 + $0x4] sm:$0xf]
        %v246 = vld [vmem:[%s206 + $0x8] sm:$0xf]
        %v247 = vld [vmem:[%s206 + $0xc] sm:$0xf]
        %v252 = vcombine.low %v244, %v245
        %v253 = vcombine.low %v246, %v247
        %v256 = vpack.c.bf16 %v253, %v252
        %v257 = vld [vmem:[%s215] sm:$0xf]
        %v258 = vld [vmem:[%s215 + $0x4] sm:$0xf]
        %v259 = vld [vmem:[%s215 + $0x8] sm:$0xf]
        %v260 = vld [vmem:[%s215 + $0xc] sm:$0xf]
        %v261 = vld [vmem:[%s2] sm:$0x1]
        %v263 = vlaneseq
        %v264 = vshrl.u32 %v263, 7
        %v265 = vsub.s32 0, %v264
        %v266 = vrot.slane %v261, %v265
        %v272 = vunpack.c.l.b16 %v257
        %v273 = vunpack.c.l.b16 %v258
        %v274 = vunpack.c.l.b16 %v259
        %v275 = vunpack.c.l.b16 %v260
        %v276 = vpack.c.b16 %v273, %v272
        %v277 = vpack.c.b16 %v275, %v274
        %vm280 = vcmask 261120
        %v282 = vsel %vm280, %v256, 0
        %284 = vmatprep.subr.bf16.mxu0 0
        %285 = vmatpush1.bf16.msra.mxu0 %v276
        %286 = vmatprep.subr.bf16.mxu0 0
        %287 = vmatpush1.bf16.msra.mxu0 %v277
        %288 = vmatprep.subr.bf16.mxu0 0
        %289 = vmatpush1.bf16.msra.mxu0 0
        %290 = vmatprep.subr.bf16.mxu0 0
        %291 = vmatpush1.bf16.msra.mxu0 0
        %292 = vmatprep.subr.bf16.mxu0 0
        %293 = vmatpush1.bf16.msra.mxu0 0
        %294 = vmatprep.subr.bf16.mxu0 0
        %295 = vmatpush1.bf16.msra.mxu0 0
        %296 = vmatprep.subr.bf16.mxu0 0
        %297 = vmatpush1.bf16.msra.mxu0 0
        %298 = vmatprep.subr.bf16.mxu0 0
        %299 = vmatpush1.bf16.msra.mxu0 0
        %300 = vmatprep.subr.bf16.mxu0 0
        %301 = vmatpush1.bf16.msra.mxu0 0
        %302 = vmatprep.subr.bf16.mxu0 0
        %303 = vmatpush1.bf16.msra.mxu0 0
        %304 = vmatprep.subr.bf16.mxu0 0
        %305 = vmatpush1.bf16.msra.mxu0 0
        %306 = vmatprep.subr.bf16.mxu0 0
        %307 = vmatpush1.bf16.msra.mxu0 0
        %308 = vmatprep.subr.bf16.mxu0 0
        %309 = vmatpush1.bf16.msra.mxu0 0
        %310 = vmatprep.subr.bf16.mxu0 0
        %311 = vmatpush1.bf16.msra.mxu0 0
        %312 = vmatprep.subr.bf16.mxu0 0
        %313 = vmatpush1.bf16.msra.mxu0 0
        %314 = vmatprep.subr.bf16.mxu0 0
        %315 = vmatpush1.bf16.msra.mxu0 0
        %316 = vmatprep.mubr.bf16.mxu0 0
        %317 = vmatmul.mubr.bf16.gmra.mrb[0].mxu0 %v282
        %v318 = vpop.f32.mrb[0].mxu0
        %v319 = vadd.f32 %v266, %v318
        %v320 = vpop.f32.mrb[0].mxu0
        %v321 = vpop.f32.mrb[0].mxu0
        %v322 = vadd.f32 %v266, %v321
        %v323 = vpop.f32.mrb[0].mxu0
        %324 = vdwg.mxu0
        %v327 = vcombine.high %v319, %v319
        %v328 = vcombine.high %v322, %v322
        %vm331 = vcmask 257024
        %332 = vst.msk [vmem:[%s242] sm:$0xf] %vm331, %v319
        %333 = vst.msk [vmem:[%s242 + $0x4] sm:$0xf] %vm331, %v327
        %334 = vst.msk [vmem:[%s242 + $0x8] sm:$0xf] %vm331, %v322
        %335 = vst.msk [vmem:[%s242 + $0xc] sm:$0xf] %vm331, %v328
        %s336 = sand.u32 %s118, 1
        %s337 = scalar_lea.sflag [#allocation4], %s336
        %s338 = sand.u32 %s118, 1
        %s339 = smul.addr %s338, 16
        %s340 = scalar_lea.vmem [#allocation7], %s339
        // Predicated region
        $region41: #{tpu_custom_call.1} parent=31 // pred_check
          %p341 = pneg %p128
        $region42: #{tpu_custom_call.1} parent=31 // pred_check_branch
          %343 = sbr.rel (%p341) target = $region44
        $region43: #{tpu_custom_call.1} parent=31 // pred_region
          %s345 = ssub.s32 256, 256
          %346 = vsyncadd %s337, %s345
          %s347 = smul.addr %s27, 8
          %s348 = sadd.s32 %s28, %s347
          %s349 = smul.addr %s348, 64
          %s350 = scalar_lea.hbm %s3, %s349
          %s351 = sshll.u32 %s340, 4
          %s352 = int_to_ptr.vmem [resolvable:$true] %s351
          %357 = dma.vmem_to_hbm [thread:$0]  %s352, 256, %s350, %s337, 64, 128, 4
        $region44: #{tpu_custom_call.1} parent=31 // pred_fallthru
          _
      $region32: #{tpu_custom_call.1} parent=5 // pred_fallthru
        _
      %p358 = scmp.le.s32.totalorder 2, %s18
      // Predicated region
      $region45: #{tpu_custom_call.1} parent=5 // pred_check
        %p359 = pneg %p358
      $region46: #{tpu_custom_call.1} parent=5 // pred_check_branch
        %361 = sbr.rel (%p359) target = $region48
      $region47: #{tpu_custom_call.1} parent=5 // pred_region
        %s362 = ssub.s32 %s18, 2
        // Predicated region
        $region49: #{tpu_custom_call.1} parent=47 // pred_check
          %p363 = pneg %p134
        $region50: #{tpu_custom_call.1} parent=47 // pred_check_branch
          %365 = sbr.rel (%p363) target = $region52
        $region51: #{tpu_custom_call.1} parent=47 // pred_region
          %s366 = sand.u32 %s119, 1
          %s367 = scalar_lea.sflag [#allocation4], %s366
          %s368 = sand.u32 %s119, 1
          %s369 = smul.addr %s368, 16
          %s370 = scalar_lea.vmem [#allocation7], %s369
          %371 = dma.done %s367, 256
        $region52: #{tpu_custom_call.1} parent=47 // pred_fallthru
          _
      $region48: #{tpu_custom_call.1} parent=5 // pred_fallthru
        _
    $region6: #{tpu_custom_call.1} parent=1 // loop_footer
      %s22 = sadd.s32 1, %s18
    $region7: #{tpu_custom_call.1} parent=1 // loop_footer_branch
      %17 = sbr.rel target = $region3
    $region8: #{tpu_custom_call.1} parent=1 // loop_exit
      _
    %372 = vsyncpa [#allocation3], 1
    %s373 = scalar_lea.sflag [#allocation3], 1
    %374 = vsyncpa %s373, 1
    %375 = vsyncpa [#allocation6], 1
    %s376 = scalar_lea.sflag [#allocation6], 1
    %377 = vsyncpa %s376, 1
    %378 = vsyncpa [#allocation4], 1
    %s379 = scalar_lea.sflag [#allocation4], 1
    %380 = vsyncpa %s379, 1

</llo_original>
